<compile_context>
chip_gen: v5e
topology: v5e:2x2
jax: 0.10.0
libtpu: 0.0.40
codegen_flags: <defaults>
</compile_context>

<pallas_src>
import numpy as np
import jax
import jax.numpy as jnp
from jax import lax
from jax.experimental import pallas as pl
from jax.experimental.pallas import tpu as pltpu


def _round_up(x, m):
    return ((x + m - 1) // m) * m


def _vmem_capacity_bytes():
    # Generation-aware physical VMEM (128 MiB on v5e/v6e, 64 MiB on v7x).
    try:
        return int(pltpu.get_tpu_info().vmem_capacity_bytes)
    except Exception:
        return 64 << 20  # conservative fallback (works on every generation)


def _vmem_limit_bytes(scratch_shape):
    # Padded footprint of the single-buffered resident copy + headroom, never above
    # physical VMEM (minus slack) and never below the default scoped limit.
    r, c = scratch_shape[-2], scratch_shape[-1]
    lead = 1
    for s in scratch_shape[:-2]:
        lead *= s
    need = 4 * lead * _round_up(r, 8) * _round_up(c, 128) + (2 << 20)
    cap = _vmem_capacity_bytes() - (8 << 20)
    return int(min(max(need, 32 << 20), cap))


# ----------------------------------------------------------------------------
# Kernel 1: H0 Rips persistence (vectorized Prim MST) fully in-kernel.
# ----------------------------------------------------------------------------
def _rips_h0_kernel(d_hbm, deaths_ref, d_vmem, dma_sem):
    n = d_vmem.shape[0]
    # NOTE: distances are assumed finite and < 1e30 (true for real distance matrices).
    big = jnp.float32(1e30)

    # Single-buffered HBM -> VMEM copy of the (reshaped) distance matrix.
    cp = pltpu.make_async_copy(d_hbm, d_vmem, dma_sem)
    cp.start()
    cp.wait()

    if len(d_vmem.shape) == 3:
        # Sublane-dense layout: row i of D lives at d_vmem[i] as an (8, n//8) slab.
        R, C = d_vmem.shape[1], d_vmem.shape[2]

        def fetch_row(j):                       # aligned O(n) slab load, no MXU
            return d_vmem[j]

        row0 = d_vmem[0]
    else:
        # Fallback (n % 8 != 0): rows are (1, n).  Fetch row j via an aligned 8-row
        # window + sublane one-hot select (padding rows of the tiled scratch are
        # masked out, never fed into arithmetic).
        R, C = 1, d_vmem.shape[1]
        sub8 = lax.broadcasted_iota(jnp.int32, (8, 1), 0)

        def fetch_row(j):
            w = pl.multiple_of(8 * (j // 8), 8)
            blk = d_vmem[pl.ds(w, 8), :]                       # (8, n)
            return jnp.sum(jnp.where(sub8 == (j % 8), blk, 0.0),
                           axis=0, keepdims=True)              # (1, n)

        row0 = d_vmem[0:1, :]

    sub = lax.broadcasted_iota(jnp.int32, (R, C), 0)
    ln = lax.broadcasted_iota(jnp.int32, (R, C), 1)
    idx = sub * C + ln                          # flat vertex id of each position

    # Deaths recorded by vertex id; vertex 0 (the root) keeps 0 and is dropped outside.
    # Births are identically D[v, v] = 0 for a zero-diagonal matrix -> not computed.
    deaths_ref[...] = jnp.zeros(deaths_ref.shape, deaths_ref.dtype)

    dist0 = jnp.where(idx == 0, big, row0)      # tree = {0}

    def body(step, dist):
        del step
        # Prim step: cheapest edge from the tree to a non-tree vertex.
        death = jnp.min(dist)                               # scalar MST edge weight
        j = jnp.min(jnp.where(dist == death, idx, n))       # scalar argmin vertex
        row_j = fetch_row(j)                                # O(n) dynamic row slice
        dist = jnp.where(jnp.logical_or(dist == big, idx == j), big,
                         jnp.minimum(dist, row_j))
        # Masked store of the death straight into the VMEM-resident output ref
        # (no births / deaths / in_tree loop carries -> only `dist` stays live).
        deaths_ref[...] = jnp.where(idx == j, death, deaths_ref[...])
        return dist

    lax.fori_loop(1, n, body, dist0)


def rips_h0_diagram(dmat):
    n = int(dmat.shape[0])
    d = dmat.astype(jnp.float32)
    if n % 8 == 0 and n >= 8:
        R, C = 8, n // 8
        d_in = d.reshape(n, R, C)               # free row-major reshape
        scratch_shape = (n, R, C)
    else:
        R, C = 1, n
        d_in = d
        scratch_shape = (n, n)

    out = pl.pallas_call(
        _rips_h0_kernel,
        out_shape=jax.ShapeDtypeStruct((R, C), jnp.float32),
        grid=(1,),
        in_specs=[pl.BlockSpec(memory_space=pl.ANY)],       # raw HBM ref, single DMA
        out_specs=pl.BlockSpec((R, C), lambda i: (0, 0)),
        scratch_shapes=[pltpu.VMEM(scratch_shape, jnp.float32),
                        pltpu.SemaphoreType.DMA],
        compiler_params=pltpu.CompilerParams(
            dimension_semantics=("arbitrary",),
            vmem_limit_bytes=_vmem_limit_bytes(scratch_shape)),
    )(d_in)

    deaths = out.reshape(n)[1:]                 # drop the root vertex (no death)
    return jnp.stack([jnp.zeros_like(deaths), deaths], axis=1)   # (n-1, 2)


# ----------------------------------------------------------------------------
# Kernel 2: the torch indexing hot path
#   dgm = stack((input[idx[:,0], idx[:,1]], input[idx[:,2], idx[:,3]]), 1)
# as a scalar-prefetch row gather: grid over K, BlockSpec row index taken from the
# prefetched indices, column picked with a lane one-hot select.
# ----------------------------------------------------------------------------
def _gather_pairs_kernel(idx_ref, rowb_ref, rowd_ref, b_ref, d_ref):
    k = pl.program_id(0)
    n = rowb_ref.shape[-1]
    lane = lax.broadcasted_iota(jnp.int32, (1, 1, n), 2)
    bcol = idx_ref[1, k]
    dcol = idx_ref[3, k]
    b_ref[...] = jnp.sum(jnp.where(lane == bcol, rowb_ref[...], 0.0),
                         axis=2, keepdims=True)
    d_ref[...] = jnp.sum(jnp.where(lane == dcol, rowd_ref[...], 0.0),
                         axis=2, keepdims=True)


def gather_generator_pairs(dmat, idx):
    K = int(idx.shape[0])
    n = int(dmat.shape[0])
    if K == 0:
        return jnp.zeros((0, 2), jnp.float32)
    # Transpose indices to (4, K): long axis last keeps the SMEM footprint small.
    idx_t = jnp.transpose(idx.astype(jnp.int32))
    # (n, 1, n): each row becomes a (1, 1, n) block whose leading block index == row id,
    # so the index_map can gather arbitrary rows (only 2K rows ever leave HBM).
    d3 = dmat.astype(jnp.float32).reshape(n, 1, n)

    births, deaths = pl.pallas_call(
        _gather_pairs_kernel,
        out_shape=(jax.ShapeDtypeStruct((K, 1, 1), jnp.float32),
                   jax.ShapeDtypeStruct((K, 1, 1), jnp.float32)),
        grid_spec=pltpu.PrefetchScalarGridSpec(
            num_scalar_prefetch=1,
            grid=(K,),
            in_specs=[pl.BlockSpec((1, 1, n), lambda k, ix: (ix[0, k], 0, 0)),
                      pl.BlockSpec((1, 1, n), lambda k, ix: (ix[2, k], 0, 0))],
            out_specs=(pl.BlockSpec((1, 1, 1), lambda k, ix: (k, 0, 0)),
                       pl.BlockSpec((1, 1, 1), lambda k, ix: (k, 0, 0)))),
        compiler_params=pltpu.CompilerParams(
            dimension_semantics=("parallel",)),   # 2-TC sharding on v7x, no-op elsewhere
    )(idx_t, d3, d3)

    return jnp.concatenate([births, deaths], axis=2).reshape(K, 2)


# ----------------------------------------------------------------------------
# Module wrapper (no learnable parameters, matching the torch __init__).
# ----------------------------------------------------------------------------
class RipsPersistenceDistance:
    def __init__(self, hom_dims):
        self.hom_dims = hom_dims

    def __call__(self, dmat):
        dgms = []
        for hom_dim in self.hom_dims:
            if hom_dim == 0:
                dgms.append(rips_h0_diagram(dmat))
            else:
                # TODO(synk): GUDHI flag_persistence_generators for hom_dim >= 1 has no
                # Pallas equivalent; return the empty-diagram branch shape.
                dgms.append(jnp.zeros((0, 2), jnp.float32))
        return dgms


if __name__ == "__main__":
    key = jax.random.PRNGKey(0)
    n = 16
    pts = jax.random.normal(key, (n, 3), dtype=jnp.float32)
    diff = pts[:, None, :] - pts[None, :, :]
    dmat = jnp.sqrt(jnp.sum(diff * diff, axis=-1))              # (16, 16), zero diag

    module = RipsPersistenceDistance(hom_dims=(0, 1))
    dgms = module(dmat)
    for dgm in dgms:
        jax.block_until_ready(dgm)

    # --- reference check for H0 (numpy Prim MST) -----------------------------
    D = np.asarray(dmat)
    in_tree = np.zeros(n, bool)
    in_tree[0] = True
    dist = D[0].copy()
    mst = []
    for _ in range(n - 1):
        masked = np.where(in_tree, np.inf, dist)
        j = int(np.argmin(masked))
        mst.append(masked[j])
        in_tree[j] = True
        dist = np.minimum(dist, D[j])
    ref_deaths = np.sort(np.asarray(mst, np.float32))

    h0 = np.asarray(dgms[0])
    assert h0.shape == (n - 1, 2)
    assert np.allclose(np.sort(h0[:, 1]), ref_deaths, atol=1e-4)
    assert np.allclose(h0[:, 0], 0.0, atol=1e-5)
    assert dgms[1].shape == (0, 2)

    # --- reference check for the generator-index gather kernel ---------------
    K = 8
    idx = jnp.array([[i, i, (i + 1) % n, (i + 3) % n] for i in range(K)],
                    dtype=jnp.int32)
    gathered = jax.block_until_ready(gather_generator_pairs(dmat, idx))
    ref = jnp.stack([dmat[idx[:, 0], idx[:, 1]],
                     dmat[idx[:, 2], idx[:, 3]]], axis=1)
    assert np.allclose(np.asarray(gathered), np.asarray(ref), atol=1e-6)

    print("KERNEL_OK")
</pallas_src>

<mosaic_0001>
module attributes {stable_mosaic.version = 11 : i64} {
  func.func @_rips_h0_kernel(%arg0: i32, %arg1: memref<16x8x2xf32, #tpu.memory_space<any>>, %arg2: memref<8x2xf32, #tpu.memory_space<vmem>>, %arg3: memref<16x8x2xf32, #tpu.memory_space<vmem>>, %arg4: memref<!tpu.dma_semaphore, #tpu.memory_space<semaphore_mem>>) attributes {dimension_semantics = [#tpu.dimension_semantics<arbitrary>], iteration_bounds = array<i64: 1>, scalar_prefetch = 0 : i64, scratch_operands = 2 : i64, tpu.core_type = #tpu.core_type<tc>, window_params = [{}, {pipeline_mode = #tpu.pipeline_mode<synchronous>, transform_indices = @transform_1, window_bounds = array<i64: 8, 2>}]} {
    tpu.enqueue_dma source(%arg1 : memref<16x8x2xf32, #tpu.memory_space<any>>) target(%arg3 : memref<16x8x2xf32, #tpu.memory_space<vmem>>) target_semaphore(%arg4 : memref<!tpu.dma_semaphore, #tpu.memory_space<semaphore_mem>>)
    tpu.wait_dma2 semaphore(%arg4 : memref<!tpu.dma_semaphore, #tpu.memory_space<semaphore_mem>>) src(%arg1 : memref<16x8x2xf32, #tpu.memory_space<any>>) dst(%arg3 : memref<16x8x2xf32, #tpu.memory_space<vmem>>)
    %c0 = arith.constant 0 : index
    %c0_0 = arith.constant 0 : index
    %c0_1 = arith.constant 0 : index
    %0 = vector.load %arg3[%c0, %c0_0, %c0_1] : memref<16x8x2xf32, #tpu.memory_space<vmem>>, vector<1x8x2xf32>
    %1 = vector.shape_cast %0 : vector<1x8x2xf32> to vector<8x2xf32>
    %2 = tpu.iota {dimensions = array<i32: 0>} : vector<8x2xi32>
    %3 = tpu.iota {dimensions = array<i32: 1>} : vector<8x2xi32>
    %c2_i32 = arith.constant 2 : i32
    %4 = vector.broadcast %c2_i32 : i32 to vector<8x2xi32>
    %5 = arith.muli %2, %4 : vector<8x2xi32>
    %6 = arith.addi %5, %3 : vector<8x2xi32>
    %cst = arith.constant 0.000000e+00 : f32
    %7 = vector.broadcast %cst : f32 to vector<8x2xf32>
    %c0_2 = arith.constant 0 : index
    %c0_3 = arith.constant 0 : index
    %8 = vector.load %arg2[%c0_2, %c0_3] : memref<8x2xf32, #tpu.memory_space<vmem>>, vector<8x2xf32>
    tpu.vector_store %arg2[%c0_2, %c0_3], %7 {strides = array<i32>} : memref<8x2xf32, #tpu.memory_space<vmem>>, vector<8x2xf32>,
    %c0_i32 = arith.constant 0 : i32
    %9 = vector.broadcast %c0_i32 : i32 to vector<8x2xi32>
    %10 = arith.cmpi eq, %6, %9 : vector<8x2xi32>
    %cst_4 = arith.constant 1.000000e+30 : f32
    %11 = vector.broadcast %cst_4 : f32 to vector<8x2xf32>
    %12 = arith.select %10, %11, %1 : vector<8x2xi1>, vector<8x2xf32>
    %cst_5 = arith.constant 1.000000e+30 : f32
    %c0_i32_6 = arith.constant 0 : i32
    %c15_i32 = arith.constant 15 : i32
    %13 = arith.addi %c0_i32_6, %c15_i32 : i32
    %c1_i32 = arith.constant 1 : i32
    %14 = scf.for %arg5 = %c0_i32_6 to %13 step %c1_i32 iter_args(%arg6 = %12) -> (vector<8x2xf32>)  : i32 {
      %15 = vector.shape_cast %arg6 : vector<8x2xf32> to vector<1x8x2xf32>
      %cst_7 = arith.constant dense<0x7F800000> : vector<1xf32>
      %16 = vector.multi_reduction <minimumf>, %15, %cst_7 [1, 2] : vector<1x8x2xf32> to vector<1xf32>
      %17 = vector.shape_cast %16 : vector<1xf32> to vector<1x1x1xf32>
      %18 = vector.extract %17[0, 0, 0] : f32 from vector<1x1x1xf32>
      %19 = vector.broadcast %18 : f32 to vector<8x2xf32>
      %20 = arith.cmpf oeq, %arg6, %19 : vector<8x2xf32>
      %c16_i32 = arith.constant 16 : i32
      %21 = vector.broadcast %c16_i32 : i32 to vector<8x2xi32>
      %22 = arith.select %20, %6, %21 : vector<8x2xi1>, vector<8x2xi32>
      %23 = vector.shape_cast %22 : vector<8x2xi32> to vector<1x8x2xi32>
      %cst_8 = arith.constant dense<2147483647> : vector<1xi32>
      %24 = vector.multi_reduction <minsi>, %23, %cst_8 [1, 2] : vector<1x8x2xi32> to vector<1xi32>
      %25 = vector.shape_cast %24 : vector<1xi32> to vector<1x1x1xi32>
      %26 = vector.extract %25[0, 0, 0] : i32 from vector<1x1x1xi32>
      %27 = arith.index_cast %26 : i32 to index
      %c0_9 = arith.constant 0 : index
      %c0_10 = arith.constant 0 : index
      %28 = vector.load %arg3[%27, %c0_9, %c0_10] : memref<16x8x2xf32, #tpu.memory_space<vmem>>, vector<1x8x2xf32>
      %29 = vector.shape_cast %28 : vector<1x8x2xf32> to vector<8x2xf32>
      %30 = vector.broadcast %cst_5 : f32 to vector<8x2xf32>
      %31 = arith.cmpf oeq, %arg6, %30 : vector<8x2xf32>
      %32 = vector.broadcast %26 : i32 to vector<8x2xi32>
      %33 = arith.cmpi eq, %6, %32 : vector<8x2xi32>
      %34 = arith.ori %31, %33 : vector<8x2xi1>
      %35 = arith.minimumf %arg6, %29 : vector<8x2xf32>
      %36 = vector.broadcast %cst_5 : f32 to vector<8x2xf32>
      %37 = arith.select %34, %36, %35 : vector<8x2xi1>, vector<8x2xf32>
      %38 = vector.broadcast %26 : i32 to vector<8x2xi32>
      %39 = arith.cmpi eq, %6, %38 : vector<8x2xi32>
      %c0_11 = arith.constant 0 : index
      %c0_12 = arith.constant 0 : index
      %40 = vector.load %arg2[%c0_11, %c0_12] : memref<8x2xf32, #tpu.memory_space<vmem>>, vector<8x2xf32>
      %41 = vector.broadcast %18 : f32 to vector<8x2xf32>
      %42 = arith.select %39, %41, %40 : vector<8x2xi1>, vector<8x2xf32>
      %c0_13 = arith.constant 0 : index
      %c0_14 = arith.constant 0 : index
      %43 = vector.load %arg2[%c0_13, %c0_14] : memref<8x2xf32, #tpu.memory_space<vmem>>, vector<8x2xf32>
      tpu.vector_store %arg2[%c0_13, %c0_14], %42 {strides = array<i32>} : memref<8x2xf32, #tpu.memory_space<vmem>>, vector<8x2xf32>,
      scf.yield %37 : vector<8x2xf32>
    }
    return
  }
  func.func @transform_1(%arg0: i32) -> (i32, i32) {
    %c0_i32 = arith.constant 0 : i32
    %c0_i32_0 = arith.constant 0 : i32
    %c0_i32_1 = arith.constant 0 : i32
    return %c0_i32, %c0_i32_0 : i32, i32
  }
}

</mosaic_0001>

<llo_original>
// kernel: tpu_custom_call.1
$region0: #{tpu_custom_call.1}
  #allocation0 [shape = 'u32[]', space=smem, size = 0x4, offset = 0x4, fixed_abs, tag = 'smem constant byte address 0x4 - core index']
  #allocation1 [shape = 'u32[72,128]{1,0:T(1,128)}', space=vmem, size = 0x9000, scoped, tag = 'internal scratch']
  #allocation2 [shape = 'f32[16,8,2]{2,1,0:T(8,128)}', space=vmem, size = 0x10000, scoped, tag = 'scratch operand']
  #allocation3 [shape = 's32[1]{0}', space=sflag, size = 0x4, scoped, tag = 'scratch operand']
  #allocation4 [shape = 's32[]', space=sflag, size = 0x4, offset = 0, fixed_abs, tag = 'sflag constant byte address 0x0 - dummy sync flag']
  %s0 = inlined_call_operand.vmem [shape: f32[16,8,2], index: 0, kind: input, shape index: {}]
  %s1 = inlined_call_operand.vmem [shape: f32[8,2], index: 1, kind: output, shape index: {}]
  %s2 = sld [smem:[#allocation0]]
  $region36: #{tpu_custom_call.1} parent=0
    _
  %s4 = ssub.s32 1, %s2
  %s5 = scalar_select 0, %s4, %s2
  // Predicated region
  $region2: #{tpu_custom_call.1} parent=0 // pred_check
    _
  $region3: #{tpu_custom_call.1} parent=0 // pred_check_branch
    %7 = sbr.rel (0) target = $region5
  $region4: #{tpu_custom_call.1} parent=0 // pred_region
    loop: start=0, step=1, limit=1
    $region6: #{tpu_custom_call.1} parent=4 // loop_pre_header
      _
    $region7: #{tpu_custom_call.1} parent=4 // loop_header
      %s9 = sphi 0, %s13
      %p10 = scmp.ge.s32.totalorder %s9, 1
      %s14 = sphi %s0, %s0
      %s15 = sphi [#allocation2], [#allocation2]
    $region8: #{tpu_custom_call.1} parent=4 // loop_header_branch
      %12 = sbr.rel (%p10) target = $region12
    $region9: #{tpu_custom_call.1} parent=4 // loop_body
      %v16 = vld [vmem:[%s14] sm:$0xff]
      %17 = vst [vmem:[%s15] sm:$0xff] %v16
      %v18 = vld [vmem:[%s14 + $0x8] sm:$0xff]
      %19 = vst [vmem:[%s15 + $0x8] sm:$0xff] %v18
      %v20 = vld [vmem:[%s14 + $0x10] sm:$0xff]
      %21 = vst [vmem:[%s15 + $0x10] sm:$0xff] %v20
      %v22 = vld [vmem:[%s14 + $0x18] sm:$0xff]
      %23 = vst [vmem:[%s15 + $0x18] sm:$0xff] %v22
      %v24 = vld [vmem:[%s14 + $0x20] sm:$0xff]
      %25 = vst [vmem:[%s15 + $0x20] sm:$0xff] %v24
      %v26 = vld [vmem:[%s14 + $0x28] sm:$0xff]
      %27 = vst [vmem:[%s15 + $0x28] sm:$0xff] %v26
      %v28 = vld [vmem:[%s14 + $0x30] sm:$0xff]
      %29 = vst [vmem:[%s15 + $0x30] sm:$0xff] %v28
      %v30 = vld [vmem:[%s14 + $0x38] sm:$0xff]
      %31 = vst [vmem:[%s15 + $0x38] sm:$0xff] %v30
      %v32 = vld [vmem:[%s14 + $0x40] sm:$0xff]
      %33 = vst [vmem:[%s15 + $0x40] sm:$0xff] %v32
      %v34 = vld [vmem:[%s14 + $0x48] sm:$0xff]
      %35 = vst [vmem:[%s15 + $0x48] sm:$0xff] %v34
      %v36 = vld [vmem:[%s14 + $0x50] sm:$0xff]
      %37 = vst [vmem:[%s15 + $0x50] sm:$0xff] %v36
      %v38 = vld [vmem:[%s14 + $0x58] sm:$0xff]
      %39 = vst [vmem:[%s15 + $0x58] sm:$0xff] %v38
      %v40 = vld [vmem:[%s14 + $0x60] sm:$0xff]
      %41 = vst [vmem:[%s15 + $0x60] sm:$0xff] %v40
      %v42 = vld [vmem:[%s14 + $0x68] sm:$0xff]
      %43 = vst [vmem:[%s15 + $0x68] sm:$0xff] %v42
      %v44 = vld [vmem:[%s14 + $0x70] sm:$0xff]
      %45 = vst [vmem:[%s15 + $0x70] sm:$0xff] %v44
      %v46 = vld [vmem:[%s14 + $0x78] sm:$0xff]
      %47 = vst [vmem:[%s15 + $0x78] sm:$0xff] %v46
    $region10: #{tpu_custom_call.1} parent=4 // loop_footer
      %s13 = sadd.s32 1, %s9
    $region11: #{tpu_custom_call.1} parent=4 // loop_footer_branch
      %8 = sbr.rel target = $region7
    $region12: #{tpu_custom_call.1} parent=4 // loop_exit
      _
  $region5: #{tpu_custom_call.1} parent=0 // pred_fallthru
    _
  // Predicated region
  $region13: #{tpu_custom_call.1} parent=0 // pred_check
    _
  $region14: #{tpu_custom_call.1} parent=0 // pred_check_branch
    %49 = sbr.rel target = $region16
  $region15: #{tpu_custom_call.1} parent=0 // pred_region
    _
  $region16: #{tpu_custom_call.1} parent=0 // pred_fallthru
    _
  // Predicated region
  $region17: #{tpu_custom_call.1} parent=0 // pred_check
    _
  $region18: #{tpu_custom_call.1} parent=0 // pred_check_branch
    %52 = sbr.rel (0) target = $region20
  $region19: #{tpu_custom_call.1} parent=0 // pred_region
    %53 = vsyncadd [#allocation3], 2048
  $region20: #{tpu_custom_call.1} parent=0 // pred_fallthru
    _
  %s54 = smul.u32 16, 8
  %s55 = smul.u32 %s54, 1
  %s56 = sshll.u32 %s55, 4
  %57 = dma.done [#allocation3], %s56
  %v58 = vld [vmem:[#allocation2] sm:$0xff]
  %v59 = vlaneseq
  %v60 = vshrl.u32 %v59, 7
  %v61 = vlaneseq
  %v62 = vand.u32 %v61, 127
  %v63 = vmul.u32 %v60, 2
  %v64 = vadd.s32 %v63, %v62
  %vm65 = vcmask 15360
  %66 = vst.msk [vmem:[%s1] sm:$0xff] %vm65, 0.0
  %vm67 = vcmp.eq.s32.totalorder %v64, 0
  %v68 = vsel %vm67, 1e+30, %v58
  loop: start=0, step=1, limit=15
  $region21: #{tpu_custom_call.1} parent=0 // loop_pre_header
    _
  $region22: #{tpu_custom_call.1} parent=0 // loop_header
    %s70 = sphi 0, %s74
    %p71 = scmp.ge.s32.totalorder %s70, 15
    %v75 = vphi %v68, %v122
  $region23: #{tpu_custom_call.1} parent=0 // loop_header_branch
    %73 = sbr.rel (%p71) target = $region27
  $region24: #{tpu_custom_call.1} parent=0 // loop_body
    %v76 = vsel %vm65, %v75, inf
    %77 = vmin.xlane.f32.xlu0 %v76
    %v78 = vpop.xlane.xlu0 %77
    %v79 = vrot.slane %v78, 4
    %v80 = vmin.f32 %v78, %v79
    %v81 = vrot.slane %v80, 2
    %v82 = vmin.f32 %v80, %v81
    %v83 = vrot.slane %v82, 1
    %v84 = vmin.f32 %v82, %v83
    %s85 = vtos %v84
    %v86 = vstv %s85
    %vm87 = vcmp.eq.f32.partialorder %v75, %v86
    %v88 = vsel %vm87, %v64, 16
    %v89 = vsel %vm65, %v88, 2147483647
    %v90 = vand.u32 %v89, 65535
    %v91 = vshra.s32 %v89, 16
    %v92 = vcvt.s32.f32 %v90
    %v93 = vcvt.s32.f32 %v91
    %94 = vmin.xlane.f32.xlu0 %v93
    %v95 = vpop.xlane.xlu0 %94
    %vm96 = vcmp.eq.f32.partialorder %v93, %v95
    %v97 = vsel %vm96, %v92, inf
    %98 = vmin.xlane.f32.xlu0 %v97
    %v99 = vpop.xlane.xlu0 %98
    %v100 = vcvt.f32.s32 %v99
    %v101 = vcvt.f32.s32 %v95
    %v102 = vshll.u32 %v101, 16
    %v103 = vadd.s32 %v102, %v100
    %v104 = vrot.slane %v103, 4
    %vm105 = vcmp.lt.s32.totalorder %v103, %v104
    %v106 = vsel %vm105, %v103, %v104
    %v107 = vrot.slane %v106, 2
    %vm108 = vcmp.lt.s32.totalorder %v106, %v107
    %v109 = vsel %vm108, %v106, %v107
    %v110 = vrot.slane %v109, 1
    %vm111 = vcmp.lt.s32.totalorder %v109, %v110
    %v112 = vsel %vm111, %v109, %v110
    %s113 = vtos %v112
    %s114 = smul.u32 %s113, 8
    %s115 = scalar_lea.vmem [#allocation2], %s114
    %v116 = vld [vmem:[%s115] sm:$0xff]
    %vm117 = vcmp.eq.f32.partialorder %v75, 1e+30
    %v118 = vstv %s113
    %vm119 = vcmp.eq.s32.totalorder %v64, %v118
    %vm120 = vmor %vm117, %vm119
    %v121 = vmin.f32 %v75, %v116
    %v122 = vsel %vm120, 1e+30, %v121
    %v123 = vld [vmem:[%s1] sm:$0xff]
    %v124 = vsel %vm119, %v86, %v123
    %125 = vst.msk [vmem:[%s1] sm:$0xff] %vm65, %v124
  $region25: #{tpu_custom_call.1} parent=0 // loop_footer
    %s74 = sadd.s32 1, %s70
  $region26: #{tpu_custom_call.1} parent=0 // loop_footer_branch
    %69 = sbr.rel target = $region22
  $region27: #{tpu_custom_call.1} parent=0 // loop_exit
    _
  // Predicated region
  $region28: #{tpu_custom_call.1} parent=0 // pred_check
    _
  $region29: #{tpu_custom_call.1} parent=0 // pred_check_branch
    %127 = sbr.rel (0) target = $region31
  $region30: #{tpu_custom_call.1} parent=0 // pred_region
    _
  $region31: #{tpu_custom_call.1} parent=0 // pred_fallthru
    _
  // Predicated region
  $region32: #{tpu_custom_call.1} parent=0 // pred_check
    _
  $region33: #{tpu_custom_call.1} parent=0 // pred_check_branch
    %129 = sbr.rel (0) target = $region35
  $region34: #{tpu_custom_call.1} parent=0 // pred_region
    _
  $region35: #{tpu_custom_call.1} parent=0 // pred_fallthru
    _
  %130 = vsyncmov [#allocation3]
  %s131 = vpop.sfrf %130
  %p132 = scmp.eq.s32.totalorder %s131, 0
  %p133 = pneg %p132
  %135 = shalt.err (%p133)

</llo_original>
